<compile_context>
chip_gen: v7x
topology: tpu7x:2x2x1
jax: 0.10.0
libtpu: 0.0.40
codegen_flags: <defaults>
</compile_context>

<pallas_src>
import math
from functools import partial

import jax
import jax.numpy as jnp
from jax.experimental import pallas as pl
from jax.experimental.pallas import tpu as pltpu

F32 = jnp.float32
BF16 = jnp.bfloat16


def _default_vmem_limit():
    phys = 128 * 1024 * 1024
    try:
        info = pltpu.get_tpu_info()
        cap = int(getattr(info, "vmem_capacity_bytes", 0) or 0)
        if cap > 0:
            phys = cap
    except Exception:
        pass
    # ~75% of physical VMEM: ~96 MiB on v5e/v6e (128 MiB), ~48 MiB on v7x (64 MiB).
    return max(32 * 1024 * 1024, (phys * 3) // 4)


VMEM_LIMIT = _default_vmem_limit()


def _tile(dim, target, align):
    """Largest divisor of `dim` that is <= target and a multiple of `align`;
    falls back to the full dim (always a legal block shape)."""
    if dim <= target:
        return dim
    t = (target // align) * align
    while t >= align:
        if dim % t == 0:
            return t
        t -= align
    return dim


def _gelu_exact(y):
    # Exact erf-GELU (HF BERT default); erf goes to the EUP, which is idle in the epilogue.
    return 0.5 * y * (1.0 + jax.lax.erf(y * 0.7071067811865475))


# --------------------------- tiled dense (+ optional activation) -------------

def _dense_kernel(x_ref, w_ref, b_ref, o_ref, acc_ref, *, act):
    k = pl.program_id(2)

    @pl.when(k == 0)
    def _():
        acc_ref[...] = jnp.zeros_like(acc_ref)

    acc_ref[...] += jnp.dot(x_ref[...].astype(BF16), w_ref[...].astype(BF16),
                            preferred_element_type=F32)

    @pl.when(k == pl.num_programs(2) - 1)
    def _():
        y = acc_ref[...] + b_ref[...].astype(F32)
        if act == "gelu":
            y = _gelu_exact(y)
        elif act == "tanh":
            y = jnp.tanh(y)
        o_ref[...] = y.astype(o_ref.dtype)


def dense(x, w, b, act=None, tm=512, tn=512, tk=512):
    M, K = x.shape
    N = w.shape[1]
    tm = _tile(M, tm, 16)     # bf16 sublane alignment
    tn = _tile(N, tn, 128)
    tk = _tile(K, tk, 128)
    grid = (M // tm, N // tn, K // tk)
    return pl.pallas_call(
        partial(_dense_kernel, act=act),
        out_shape=jax.ShapeDtypeStruct((M, N), x.dtype),
        grid=grid,
        in_specs=[pl.BlockSpec((tm, tk), lambda i, j, k: (i, k)),
                  pl.BlockSpec((tk, tn), lambda i, j, k: (k, j)),
                  pl.BlockSpec((1, tn), lambda i, j, k: (0, j))],
        out_specs=pl.BlockSpec((tm, tn), lambda i, j, k: (i, j)),
        scratch_shapes=[pltpu.VMEM((tm, tn), F32)],
        compiler_params=pltpu.CompilerParams(
            dimension_semantics=("parallel", "parallel", "arbitrary"),
            vmem_limit_bytes=VMEM_LIMIT),
    )(x, w, b.reshape(1, N))


# ---------------- tiled dense with fused residual-add + LayerNorm epilogue ---

def _dense_res_ln_kernel(x_ref, w_ref, b_ref, r_ref, g_ref, bt_ref, o_ref, acc_ref,
                         *, eps):
    k = pl.program_id(1)

    @pl.when(k == 0)
    def _():
        acc_ref[...] = jnp.zeros_like(acc_ref)

    acc_ref[...] += jnp.dot(x_ref[...].astype(BF16), w_ref[...].astype(BF16),
                            preferred_element_type=F32)

    @pl.when(k == pl.num_programs(1) - 1)
    def _():
        y = acc_ref[...] + b_ref[...].astype(F32) + r_ref[...].astype(F32)
        mu = jnp.mean(y, axis=-1, keepdims=True)
        yc = y - mu
        var = jnp.mean(yc * yc, axis=-1, keepdims=True)
        out = yc * jax.lax.rsqrt(var + eps) * g_ref[...].astype(F32) \
            + bt_ref[...].astype(F32)
        o_ref[...] = out.astype(o_ref.dtype)


def dense_residual_layernorm(x, w, b, residual, gamma, beta, eps=1e-12,
                             tm=512, tk=512):
    """y = LayerNorm((x @ w + b) + residual); LN reduces over the full N, so the
    output is kept lane-dense and only M and K are tiled."""
    M, K = x.shape
    N = w.shape[1]
    tm = _tile(M, tm, 16)
    tk = _tile(K, tk, 128)
    grid = (M // tm, K // tk)
    return pl.pallas_call(
        partial(_dense_res_ln_kernel, eps=eps),
        out_shape=jax.ShapeDtypeStruct((M, N), x.dtype),
        grid=grid,
        in_specs=[pl.BlockSpec((tm, tk), lambda i, k: (i, k)),
                  pl.BlockSpec((tk, N), lambda i, k: (k, 0)),
                  pl.BlockSpec((1, N), lambda i, k: (0, 0)),
                  pl.BlockSpec((tm, N), lambda i, k: (i, 0)),
                  pl.BlockSpec((1, N), lambda i, k: (0, 0)),
                  pl.BlockSpec((1, N), lambda i, k: (0, 0))],
        out_specs=pl.BlockSpec((tm, N), lambda i, k: (i, 0)),
        scratch_shapes=[pltpu.VMEM((tm, N), F32)],
        compiler_params=pltpu.CompilerParams(
            dimension_semantics=("parallel", "arbitrary"),
            vmem_limit_bytes=VMEM_LIMIT),
    )(x, w, b.reshape(1, N), residual, gamma.reshape(1, N), beta.reshape(1, N))


# ------------------------------ row-tiled LayerNorm ---------------------------

def _ln_kernel(x_ref, g_ref, b_ref, o_ref, *, eps):
    x = x_ref[...].astype(F32)
    mu = jnp.mean(x, axis=-1, keepdims=True)
    xc = x - mu
    var = jnp.mean(xc * xc, axis=-1, keepdims=True)
    o_ref[...] = (xc * jax.lax.rsqrt(var + eps) * g_ref[...].astype(F32)
                  + b_ref[...].astype(F32)).astype(o_ref.dtype)


def layernorm(x, gamma, beta, eps=1e-12, tm=512):
    M, H = x.shape
    tm = _tile(M, tm, 16)
    return pl.pallas_call(
        partial(_ln_kernel, eps=eps),
        out_shape=jax.ShapeDtypeStruct((M, H), x.dtype),
        grid=(M // tm,),
        in_specs=[pl.BlockSpec((tm, H), lambda i: (i, 0)),
                  pl.BlockSpec((1, H), lambda i: (0, 0)),
                  pl.BlockSpec((1, H), lambda i: (0, 0))],
        out_specs=pl.BlockSpec((tm, H), lambda i: (i, 0)),
        compiler_params=pltpu.CompilerParams(
            dimension_semantics=("parallel",),
            vmem_limit_bytes=VMEM_LIMIT),
    )(x, gamma.reshape(1, H), beta.reshape(1, H))


# ---------------- flash attention over fused QKV, lane-dense I/O --------------

def _attn_kernel(q_ref, k_ref, v_ref, mask_ref, o_ref, m_sc, l_sc, acc_sc,
                 *, scale, nh, dh):
    ki = pl.program_id(2)

    @pl.when(ki == 0)
    def _():
        m_sc[...] = jnp.full(m_sc.shape, -1e30, dtype=F32)
        l_sc[...] = jnp.zeros(l_sc.shape, dtype=F32)
        acc_sc[...] = jnp.zeros(acc_sc.shape, dtype=F32)

    q_all = q_ref[0].astype(BF16)          # (tq,  H)  heads packed on lanes
    k_all = k_ref[0].astype(BF16)          # (tkv, H)
    v_all = v_ref[0].astype(BF16)          # (tkv, H)
    mask = mask_ref[0].astype(F32)         # (1, tkv) additive mask

    for h in range(nh):                    # static unroll over heads
        lo = h * dh
        q = q_all[:, lo:lo + dh]
        k = k_all[:, lo:lo + dh]
        v = v_all[:, lo:lo + dh]
        # QK^T with K consumed untransposed (contract on last dims).
        s = jax.lax.dot_general(q, k, (((1,), (1,)), ((), ())),
                                preferred_element_type=F32) * scale + mask
        m_prev = m_sc[h]                                       # (tq, 1)
        m_new = jnp.maximum(m_prev, jnp.max(s, axis=-1, keepdims=True))
        alpha = jnp.exp(m_prev - m_new)
        p = jnp.exp(s - m_new)
        l_sc[h] = alpha * l_sc[h] + jnp.sum(p, axis=-1, keepdims=True)
        acc_sc[h] = alpha * acc_sc[h] + jnp.dot(p.astype(BF16), v,
                                                preferred_element_type=F32)
        m_sc[h] = m_new

    @pl.when(ki == pl.num_programs(2) - 1)
    def _():
        parts = [acc_sc[h] / l_sc[h] for h in range(nh)]
        o_ref[0] = jnp.concatenate(parts, axis=-1).astype(o_ref.dtype)


def attention(qkv, add_mask, nh, scale, tq=256, tkv=512):
    """qkv: (B, S, 3H) fused projections; add_mask: (B, 1, S) additive mask.
    Returns context (B, S, H) with heads merged back onto the lane axis."""
    B, S, H3 = qkv.shape
    H = H3 // 3
    dh = H // nh
    tq = _tile(S, tq, 16)
    tkv = _tile(S, tkv, 16)
    grid = (B, S // tq, S // tkv)

    if H % 128 == 0:
        # Fast path: index Q/K/V directly out of the fused tensor via lane-block offsets.
        q_in, k_in, v_in = qkv, qkv, qkv
        q_spec = pl.BlockSpec((1, tq, H), lambda b, qi, ki: (b, qi, 0))
        k_spec = pl.BlockSpec((1, tkv, H), lambda b, qi, ki: (b, ki, 1))
        v_spec = pl.BlockSpec((1, tkv, H), lambda b, qi, ki: (b, ki, 2))
    else:
        # TODO(synk): hidden not a multiple of 128 -> split Q/K/V with XLA lane slices.
        q_in, k_in, v_in = qkv[..., :H], qkv[..., H:2 * H], qkv[..., 2 * H:]
        q_spec = pl.BlockSpec((1, tq, H), lambda b, qi, ki: (b, qi, 0))
        k_spec = pl.BlockSpec((1, tkv, H), lambda b, qi, ki: (b, ki, 0))
        v_spec = pl.BlockSpec((1, tkv, H), lambda b, qi, ki: (b, ki, 0))

    return pl.pallas_call(
        partial(_attn_kernel, scale=scale, nh=nh, dh=dh),
        out_shape=jax.ShapeDtypeStruct((B, S, H), qkv.dtype),
        grid=grid,
        in_specs=[q_spec, k_spec, v_spec,
                  pl.BlockSpec((1, 1, tkv), lambda b, qi, ki: (b, 0, ki))],
        out_specs=pl.BlockSpec((1, tq, H), lambda b, qi, ki: (b, qi, 0)),
        scratch_shapes=[pltpu.VMEM((nh, tq, 1), F32),     # running max
                        pltpu.VMEM((nh, tq, 1), F32),     # running denom
                        pltpu.VMEM((nh, tq, dh), F32)],   # running numerator
        compiler_params=pltpu.CompilerParams(
            dimension_semantics=("parallel", "parallel", "arbitrary"),
            vmem_limit_bytes=VMEM_LIMIT),
    )(q_in, k_in, v_in, add_mask)


# --------------------- fused pooler (dense+tanh) + classifier -----------------

def _pool_cls_kernel(x_ref, pw_ref, pb_ref, cw_ref, cb_ref, pooled_ref, logit_ref):
    x = x_ref[...].astype(BF16)
    pooled = jnp.tanh(jnp.dot(x, pw_ref[...].astype(BF16),
                              preferred_element_type=F32) + pb_ref[...].astype(F32))
    pooled_ref[...] = pooled.astype(pooled_ref.dtype)
    logits = jnp.dot(pooled.astype(BF16), cw_ref[...].astype(BF16),
                     preferred_element_type=F32) + cb_ref[...].astype(F32)
    logit_ref[...] = logits.astype(logit_ref.dtype)


def pooler_classifier(cls_tokens, pool_w, pool_b, cls_w, cls_b, pad_to=128):
    B, H = cls_tokens.shape
    n_out = cls_w.shape[1]
    # pad the classifier to a lane-dense (>=128) output; slice real logits in JAX
    cw = jnp.zeros((H, pad_to), F32).at[:, :n_out].set(cls_w)
    cb = jnp.zeros((1, pad_to), F32).at[:, :n_out].set(cls_b.reshape(1, n_out))
    vmem = pl.BlockSpec(memory_space=pltpu.MemorySpace.VMEM)
    pooled, logits_pad = pl.pallas_call(
        _pool_cls_kernel,
        out_shape=(jax.ShapeDtypeStruct((B, H), F32),
                   jax.ShapeDtypeStruct((B, pad_to), F32)),
        in_specs=[vmem] * 5,
        out_specs=(vmem, vmem),
        compiler_params=pltpu.CompilerParams(vmem_limit_bytes=VMEM_LIMIT),
    )(cls_tokens, pool_w, pool_b.reshape(1, H), cw, cb)
    return pooled, logits_pad[:, :n_out]


# ------------------------------ model glue ------------------------------------

def init_params(key, cfg):
    H, I = cfg["hidden"], cfg["intermediate"]
    n_keys = 5 + 4 * cfg["layers"]
    keys = iter(jax.random.split(key, n_keys))

    def w(shape, dtype=BF16):   # weights stored bf16 in HBM (halves DMA bytes)
        return (jax.random.normal(next(keys), shape, F32) * 0.02).astype(dtype)

    def zeros(n):
        return jnp.zeros((n,), F32)

    def ones(n):
        return jnp.ones((n,), F32)

    params = {
        "word_emb": w((cfg["vocab"], H)),
        "pos_emb": w((cfg["max_pos"], H)),
        "type_emb": w((cfg["type_vocab"], H)),
        "emb_ln_g": ones(H), "emb_ln_b": zeros(H),
        "layers": [],
        "pool_w": w((H, H)), "pool_b": zeros(H),
        "cls_w": w((H, 1), F32), "cls_b": zeros(1),      # KorSTS regression head
    }
    for _ in range(cfg["layers"]):
        params["layers"].append({
            "qkv_w": w((H, 3 * H)), "qkv_b": zeros(3 * H),   # fused Q|K|V
            "o_w": w((H, H)), "o_b": zeros(H),
            "ln1_g": ones(H), "ln1_b": zeros(H),
            "fc1_w": w((H, I)), "fc1_b": zeros(I),
            "fc2_w": w((I, H)), "fc2_b": zeros(H),
            "ln2_g": ones(H), "ln2_b": zeros(H),
        })
    return params


def bert_encoder(params, input_ids, token_type_ids, attention_mask, cfg,
                 output_hidden_states=True):
    B, S = input_ids.shape
    H, nh = cfg["hidden"], cfg["heads"]
    dh = H // nh
    M = B * S

    # ---- embeddings (gathers are XLA glue) + dedicated LayerNorm kernel
    pos_ids = jnp.arange(S, dtype=jnp.int32)[None, :]
    emb = (jnp.take(params["word_emb"], input_ids, axis=0)
           + jnp.take(params["pos_emb"], pos_ids, axis=0)
           + jnp.take(params["type_emb"], token_type_ids, axis=0))
    x = layernorm(emb.reshape(M, H), params["emb_ln_g"], params["emb_ln_b"])

    # ---- BERT extended additive attention mask, kept at (B, 1, S) (no per-head copy)
    add_mask = (1.0 - attention_mask.astype(F32))[:, None, :] * -1e9

    hidden_states = [x.reshape(B, S, H)] if output_hidden_states else None
    scale = 1.0 / math.sqrt(dh)
    for lp in params["layers"]:
        # fused QKV projection: one pallas_call, x read from HBM once
        qkv = dense(x, lp["qkv_w"], lp["qkv_b"])                   # (M, 3H) bf16
        # no head split/merge transposes: the attention kernel slices heads on lanes
        ctx = attention(qkv.reshape(B, S, 3 * H), add_mask, nh, scale)
        ctx = ctx.reshape(M, H)

        # output projection with fused residual-add + LayerNorm epilogue
        x = dense_residual_layernorm(ctx, lp["o_w"], lp["o_b"],
                                     x, lp["ln1_g"], lp["ln1_b"])

        ff = dense(x, lp["fc1_w"], lp["fc1_b"], act="gelu")
        x = dense_residual_layernorm(ff, lp["fc2_w"], lp["fc2_b"],
                                     x, lp["ln2_g"], lp["ln2_b"])

        if output_hidden_states:
            hidden_states.append(x.reshape(B, S, H))

    return x.reshape(B, S, H), hidden_states


def korsts_forward(params, inputs, cfg):
    last_hidden, hidden_states = bert_encoder(
        params, inputs["input_ids"], inputs["token_type_ids"],
        inputs["attention_mask"], cfg, output_hidden_states=True)
    cls = last_hidden[:, 0, :]                                     # (B, H) bf16
    # pooler (dense + tanh) fused with the classifier head;
    # nn.Dropout(hidden_dropout_prob) is the identity at inference time.
    pooled, logits = pooler_classifier(cls, params["pool_w"], params["pool_b"],
                                       params["cls_w"], params["cls_b"])
    outputs = {
        "last_hidden_state": last_hidden.astype(F32),   # final outputs in f32
        "pooler_output": pooled,
        "hidden_states": tuple(hidden_states),          # intermediate states stay bf16
    }
    logits = logits.reshape(-1)                          # Linear(H,1) -> view(-1)
    return outputs, logits


if __name__ == "__main__":
    # small demo config; hidden=128 keeps the lane-dense fused-QKV attention path
    cfg = dict(vocab=128, hidden=128, heads=2, intermediate=256, layers=2,
               max_pos=16, type_vocab=2)
    key = jax.random.PRNGKey(0)
    pkey, dkey = jax.random.split(key)
    params = init_params(pkey, cfg)

    B, S = 2, 8
    input_ids = jax.random.randint(dkey, (B, S), 0, cfg["vocab"], dtype=jnp.int32)
    token_type_ids = jnp.zeros((B, S), jnp.int32)
    attention_mask = jnp.ones((B, S), jnp.int32)
    inputs = {"input_ids": input_ids,
              "token_type_ids": token_type_ids,
              "attention_mask": attention_mask}

    outputs, logits = korsts_forward(params, inputs, cfg)
    jax.block_until_ready((outputs["last_hidden_state"],
                           outputs["pooler_output"], logits))
    assert logits.shape == (B,)
    assert outputs["pooler_output"].shape == (B, cfg["hidden"])
    assert outputs["last_hidden_state"].shape == (B, S, cfg["hidden"])
    assert len(outputs["hidden_states"]) == cfg["layers"] + 1
    assert bool(jnp.isfinite(logits).all())
    print("KERNEL_OK")
</pallas_src>

<mosaic_0001>
module attributes {stable_mosaic.version = 11 : i64} {
  func.func @_ln_kernel(%arg0: i32, %arg1: memref<16x128xbf16, #tpu.memory_space<vmem>>, %arg2: memref<1x128xf32, #tpu.memory_space<vmem>>, %arg3: memref<1x128xf32, #tpu.memory_space<vmem>>, %arg4: memref<16x128xbf16, #tpu.memory_space<vmem>>) attributes {dimension_semantics = [#tpu.dimension_semantics<parallel>], iteration_bounds = array<i64: 1>, scalar_prefetch = 0 : i64, scratch_operands = 0 : i64, tpu.core_type = #tpu.core_type<tc>, window_params = [{transform_indices = @transform_0, window_bounds = array<i64: 16, 128>}, {pipeline_mode = #tpu.pipeline_mode<synchronous>, transform_indices = @transform_1, window_bounds = array<i64: 1, 128>}, {pipeline_mode = #tpu.pipeline_mode<synchronous>, transform_indices = @transform_2, window_bounds = array<i64: 1, 128>}, {transform_indices = @transform_3, window_bounds = array<i64: 16, 128>}]} {
    %c0 = arith.constant 0 : index
    %c0_0 = arith.constant 0 : index
    %0 = vector.load %arg1[%c0, %c0_0] : memref<16x128xbf16, #tpu.memory_space<vmem>>, vector<16x128xbf16>
    %1 = arith.extf %0 : vector<16x128xbf16> to vector<16x128xf32>
    %cst = arith.constant dense<0.000000e+00> : vector<16xf32>
    %2 = vector.multi_reduction <add>, %1, %cst [1] : vector<16x128xf32> to vector<16xf32>
    %3 = vector.shape_cast %2 : vector<16xf32> to vector<16x1xf32>
    %cst_1 = arith.constant 1.280000e+02 : f32
    %4 = vector.broadcast %cst_1 : f32 to vector<16x1xf32>
    %5 = arith.divf %3, %4 : vector<16x1xf32>
    %6 = vector.broadcast %5 : vector<16x1xf32> to vector<16x128xf32>
    %7 = arith.subf %1, %6 : vector<16x128xf32>
    %8 = arith.mulf %7, %7 : vector<16x128xf32>
    %cst_2 = arith.constant dense<0.000000e+00> : vector<16xf32>
    %9 = vector.multi_reduction <add>, %8, %cst_2 [1] : vector<16x128xf32> to vector<16xf32>
    %10 = vector.shape_cast %9 : vector<16xf32> to vector<16x1xf32>
    %cst_3 = arith.constant 1.280000e+02 : f32
    %11 = vector.broadcast %cst_3 : f32 to vector<16x1xf32>
    %12 = arith.divf %10, %11 : vector<16x1xf32>
    %cst_4 = arith.constant 9.99999996E-13 : f32
    %13 = vector.broadcast %cst_4 : f32 to vector<16x1xf32>
    %14 = arith.addf %12, %13 : vector<16x1xf32>
    %15 = math.rsqrt %14 : vector<16x1xf32>
    %16 = vector.broadcast %15 : vector<16x1xf32> to vector<16x128xf32>
    %17 = arith.mulf %7, %16 : vector<16x128xf32>
    %c0_5 = arith.constant 0 : index
    %c0_6 = arith.constant 0 : index
    %18 = vector.load %arg2[%c0_5, %c0_6] : memref<1x128xf32, #tpu.memory_space<vmem>>, vector<1x128xf32>
    %19 = vector.broadcast %18 : vector<1x128xf32> to vector<16x128xf32>
    %20 = arith.mulf %17, %19 : vector<16x128xf32>
    %c0_7 = arith.constant 0 : index
    %c0_8 = arith.constant 0 : index
    %21 = vector.load %arg3[%c0_7, %c0_8] : memref<1x128xf32, #tpu.memory_space<vmem>>, vector<1x128xf32>
    %22 = vector.broadcast %21 : vector<1x128xf32> to vector<16x128xf32>
    %23 = arith.addf %20, %22 : vector<16x128xf32>
    %24 = arith.truncf %23 : vector<16x128xf32> to vector<16x128xbf16>
    %c0_9 = arith.constant 0 : index
    %c0_10 = arith.constant 0 : index
    %25 = vector.load %arg4[%c0_9, %c0_10] : memref<16x128xbf16, #tpu.memory_space<vmem>>, vector<16x128xbf16>
    tpu.vector_store %arg4[%c0_9, %c0_10], %24 {strides = array<i32>} : memref<16x128xbf16, #tpu.memory_space<vmem>>, vector<16x128xbf16>,
    return
  }
  func.func @transform_0(%arg0: i32) -> (i32, i32) {
    %c0_i32 = arith.constant 0 : i32
    %c0_i32_0 = arith.constant 0 : i32
    return %arg0, %c0_i32 : i32, i32
  }
  func.func @transform_1(%arg0: i32) -> (i32, i32) {
    %c0_i32 = arith.constant 0 : i32
    %c0_i32_0 = arith.constant 0 : i32
    %c0_i32_1 = arith.constant 0 : i32
    return %c0_i32, %c0_i32_0 : i32, i32
  }
  func.func @transform_2(%arg0: i32) -> (i32, i32) {
    %c0_i32 = arith.constant 0 : i32
    %c0_i32_0 = arith.constant 0 : i32
    %c0_i32_1 = arith.constant 0 : i32
    return %c0_i32, %c0_i32_0 : i32, i32
  }
  func.func @transform_3(%arg0: i32) -> (i32, i32) {
    %c0_i32 = arith.constant 0 : i32
    %c0_i32_0 = arith.constant 0 : i32
    return %arg0, %c0_i32 : i32, i32
  }
}

</mosaic_0001>

<llo_original>
// kernel: tpu_custom_call.1
$region0: #{tpu_custom_call.1}
  #allocation0 [shape = 'u32[]', space=smem, size = 0x4, offset = 0x4, fixed_abs, tag = 'smem constant byte address 0x4 - core index']
  #allocation1 [shape = 'u32[144,128]{1,0:T(1,128)}', space=vmem, size = 0x12000, scoped, tag = 'internal scratch']
  %s0 = inlined_call_operand.hbm [shape: bf16[16,128], index: 0, kind: input, shape index: {}]
  %s1 = inlined_call_operand.hbm [shape: f32[1,128], index: 1, kind: input, shape index: {}]
  %s2 = inlined_call_operand.hbm [shape: f32[1,128], index: 2, kind: input, shape index: {}]
  %s3 = inlined_call_operand.hbm [shape: bf16[16,128], index: 3, kind: output, shape index: {}]
  %s4 = sld [smem:[#allocation0]]
  $region34: #{tpu_custom_call.1} parent=0
    _
  %s6 = ssub.s32 1, %s4
  %s7 = scalar_select 0, %s6, %s4
  $region1: #{tpu_custom_call.1} parent=0
    #allocation2 [shape = 'u8[4096]{0}', space=vmem, size = 0x1000, scoped, tag = 'input window, operand 0, single buffered']
    #allocation3 [shape = 's32[1]{0}', space=sflag, size = 0x4, scoped, tag = 'scoped memory for tpu_custom_call.1']
    #allocation4 [shape = 's32[1]{0}', space=sflag, size = 0x4, scoped, tag = 'scoped memory for tpu_custom_call.1']
    #allocation5 [shape = 'u8[512]{0}', space=vmem, size = 0x400, scoped, tag = 'input window, operand 1, single buffered']
    #allocation6 [shape = 's32[1]{0}', space=sflag, size = 0x4, scoped, tag = 'scoped memory for tpu_custom_call.1']
    #allocation7 [shape = 'u8[512]{0}', space=vmem, size = 0x400, scoped, tag = 'input window, operand 2, single buffered']
    #allocation8 [shape = 'u8[4096]{0}', space=vmem, size = 0x1000, scoped, tag = 'output window, operand 0, single buffered']
    %8 = vsyncpa [#allocation3], 0
    %9 = vsyncpa [#allocation6], 0
    %10 = vsyncpa [#allocation4], 0
    // Predicated region
    $region2: #{tpu_custom_call.1} parent=1 // pred_check
      _
    $region3: #{tpu_custom_call.1} parent=1 // pred_check_branch
      %12 = sbr.rel (0) target = $region5
    $region4: #{tpu_custom_call.1} parent=1 // pred_region
      %s14 = ssub.s32 128, 128
      %15 = vsyncadd [#allocation3], %s14
      %s16 = sshll.u32 [#allocation2], 4
      %s17 = int_to_ptr.vmem [resolvable:$true] %s16
      %22 = dma.hbm_to_vmem [thread:$0]  %s0, 128, %s17, [#allocation3], 64, 64, 4
    $region5: #{tpu_custom_call.1} parent=1 // pred_fallthru
      _
    // Predicated region
    $region6: #{tpu_custom_call.1} parent=1 // pred_check
      _
    $region7: #{tpu_custom_call.1} parent=1 // pred_check_branch
      %24 = sbr.rel (0) target = $region9
    $region8: #{tpu_custom_call.1} parent=1 // pred_region
      %s26 = ssub.s32 16, 16
      %27 = vsyncadd [#allocation6], %s26
      %s29 = sshll.u32 [#allocation5], 4
      %s30 = int_to_ptr.vmem [resolvable:$true] %s29
      %32 = dma.hbm_to_vmem [thread:$0]  %s1, 16, %s30, [#allocation6]
    $region9: #{tpu_custom_call.1} parent=1 // pred_fallthru
      _
    // Predicated region
    $region10: #{tpu_custom_call.1} parent=1 // pred_check
      _
    $region11: #{tpu_custom_call.1} parent=1 // pred_check_branch
      %34 = sbr.rel (0) target = $region13
    $region12: #{tpu_custom_call.1} parent=1 // pred_region
      %s36 = ssub.s32 16, 16
      %37 = vsyncadd [#allocation6], %s36
      %s39 = sshll.u32 [#allocation7], 4
      %s40 = int_to_ptr.vmem [resolvable:$true] %s39
      %42 = dma.hbm_to_vmem [thread:$0]  %s2, 16, %s40, [#allocation6]
    $region13: #{tpu_custom_call.1} parent=1 // pred_fallthru
      _
    // Predicated region
    $region14: #{tpu_custom_call.1} parent=1 // pred_check
      _
    $region15: #{tpu_custom_call.1} parent=1 // pred_check_branch
      %44 = sbr.rel (0) target = $region17
    $region16: #{tpu_custom_call.1} parent=1 // pred_region
      %45 = dma.done [#allocation3], 128
    $region17: #{tpu_custom_call.1} parent=1 // pred_fallthru
      _
    // Predicated region
    $region18: #{tpu_custom_call.1} parent=1 // pred_check
      _
    $region19: #{tpu_custom_call.1} parent=1 // pred_check_branch
      %47 = sbr.rel (0) target = $region21
    $region20: #{tpu_custom_call.1} parent=1 // pred_region
      %48 = dma.done [#allocation6], 16
    $region21: #{tpu_custom_call.1} parent=1 // pred_fallthru
      _
    // Predicated region
    $region22: #{tpu_custom_call.1} parent=1 // pred_check
      _
    $region23: #{tpu_custom_call.1} parent=1 // pred_check_branch
      %50 = sbr.rel (0) target = $region25
    $region24: #{tpu_custom_call.1} parent=1 // pred_region
      %51 = dma.done [#allocation6], 16
    $region25: #{tpu_custom_call.1} parent=1 // pred_fallthru
      _
    %v52 = vld [vmem:[#allocation2] sm:$0xf]
    %v53 = vld [vmem:[#allocation2 + $0x4] sm:$0xf]
    %v54 = vunpack.c.l.bf16 %v52
    %v55 = vunpack.c.l.bf16 %v53
    %56 = vadd.xlane.f32.xlu0 %v54
    %v57 = vpop.xlane.xlu0 %56
    %58 = vadd.xlane.f32.xlu0 %v55
    %v59 = vpop.xlane.xlu0 %58
    %v60 = vrcp.pop 128.0
    %v61 = vmul.f32 %v57, %v60
    %v62 = vmul.f32 %v59, %v60
    %v63 = vsub.f32 %v54, %v61
    %v64 = vsub.f32 %v55, %v62
    %v65 = vmul.f32 %v63, %v63
    %v66 = vmul.f32 %v64, %v64
    %67 = vadd.xlane.f32.xlu0 %v65
    %v68 = vpop.xlane.xlu0 %67
    %69 = vadd.xlane.f32.xlu0 %v66
    %v70 = vpop.xlane.xlu0 %69
    %v71 = vmul.f32 %v68, %v60
    %v72 = vmul.f32 %v70, %v60
    %v73 = vadd.f32 %v71, 1e-12
    %v74 = vadd.f32 %v72, 1e-12
    %v75 = vrsqrt.pop %v73
    %v76 = vrsqrt.pop %v74
    %v77 = vmul.f32 %v63, %v75
    %v78 = vmul.f32 %v64, %v76
    %v79 = vld [vmem:[#allocation5] sm:$0x1]
    %v81 = vlaneseq
    %v82 = vshrl.u32 %v81, 7
    %v83 = vsub.s32 0, %v82
    %v84 = vrot.slane %v79, %v83
    %v86 = vmul.f32 %v77, %v84
    %v87 = vmul.f32 %v78, %v84
    %v88 = vld [vmem:[#allocation7] sm:$0x1]
    %v90 = vlaneseq
    %v91 = vshrl.u32 %v90, 7
    %v92 = vsub.s32 0, %v91
    %v93 = vrot.slane %v88, %v92
    %v95 = vadd.f32 %v86, %v93
    %v96 = vadd.f32 %v87, %v93
    %v97 = vpack.c.bf16 %v96, %v95
    %v99 = vunpack.c.l.b16 %v97
    %v100 = vunpack.c.h.b16 %v97
    %v101 = vpack.c.b16 %v99, %v99
    %v102 = vpack.c.b16 %v100, %v100
    %105 = vst [vmem:[#allocation8] sm:$0xf] %v101
    %106 = vst [vmem:[#allocation8 + $0x4] sm:$0xf] %v102
    // Predicated region
    $region26: #{tpu_custom_call.1} parent=1 // pred_check
      _
    $region27: #{tpu_custom_call.1} parent=1 // pred_check_branch
      %108 = sbr.rel (0) target = $region29
    $region28: #{tpu_custom_call.1} parent=1 // pred_region
      %s110 = ssub.s32 128, 128
      %111 = vsyncadd [#allocation4], %s110
      %s112 = sshll.u32 [#allocation8], 4
      %s113 = int_to_ptr.vmem [resolvable:$true] %s112
      %118 = dma.vmem_to_hbm [thread:$0]  %s113, 128, %s3, [#allocation4], 64, 64, 4
    $region29: #{tpu_custom_call.1} parent=1 // pred_fallthru
      _
    // Predicated region
    $region30: #{tpu_custom_call.1} parent=1 // pred_check
      _
    $region31: #{tpu_custom_call.1} parent=1 // pred_check_branch
      %120 = sbr.rel (0) target = $region33
    $region32: #{tpu_custom_call.1} parent=1 // pred_region
      %121 = dma.done [#allocation4], 128
    $region33: #{tpu_custom_call.1} parent=1 // pred_fallthru
      _
    %122 = vsyncpa [#allocation3], 1
    %123 = vsyncpa [#allocation6], 1
    %124 = vsyncpa [#allocation4], 1

</llo_original>
